<compile_context>
chip_gen: v7x
topology: tpu7x:2x2x1
jax: 0.10.0
libtpu: 0.0.40
codegen_flags: <defaults>
</compile_context>

<pallas_src>
import functools

import numpy as np
import jax
import jax.numpy as jnp
from jax.experimental import pallas as pl
from jax.experimental.pallas import tpu as pltpu


def _round_up(x: int, m: int) -> int:
    return ((x + m - 1) // m) * m


def decoder_fused_kernel(y_ref, w1_ref, b1_ref, w2_ref, b2_ref,
                         w3s_ref, b3s_ref, wc_ref, o_ref, *, M):
    """Fully fused decoder forward for one batch tile.

    x = y[:, :M] @ Wc                                   (control scatter, as matmul)
      + relu(relu(y[:, M:] @ W1 + b1) @ W2 + b2) @ W3s  (MLP + non-control scatter)
      + b3s
    W3s / b3s already contain the non-control column permutation, and Wc is the
    0/1 control scatter matrix, so o_ref holds the final (TILE_B, nx) layout.
    """
    y = y_ref[...]
    y_c = y[:, :M]           # (TILE_B, M)      control inputs
    y_nc = y[:, M:]          # (TILE_B, P - M)  MLP inputs

    h1 = jnp.dot(y_nc, w1_ref[...], preferred_element_type=jnp.float32) + b1_ref[...]
    h1 = jnp.maximum(h1, 0.0)
    # TODO(synk): training-mode Dropout(0.1) would need pltpu.prng_seed +
    # pltpu.stateful_bernoulli; eval mode (the reference semantics) is identity.
    h2 = jnp.dot(h1, w2_ref[...], preferred_element_type=jnp.float32) + b2_ref[...]
    h2 = jnp.maximum(h2, 0.0)

    o_ref[...] = (
        jnp.dot(y_c, wc_ref[...], preferred_element_type=jnp.float32)
        + jnp.dot(h2, w3s_ref[...], preferred_element_type=jnp.float32)
        + b3s_ref[...]
    )


class DecoderPallas:
    """JAX/Pallas port of the PyTorch Decoder module (inference semantics)."""

    def __init__(self, nx, M, hidden_dim, P, control_positions, key):
        self.nx = nx
        self.M = M
        self.P = P
        self.hidden_dim = hidden_dim
        self.control_positions = np.asarray(control_positions, dtype=np.int32)

        mask = np.ones(nx, dtype=bool)
        mask[self.control_positions] = False
        self.non_control_positions = np.where(mask)[0].astype(np.int32)

        d_in, H, d_out = P - M, hidden_dim, nx - M

        # Deterministic parameter init. Weights stored as (in, out) so the kernel
        # computes y @ W + b (equivalent to torch's y @ W_t.T + b).
        k1, k2, k3, k4, k5, k6 = jax.random.split(key, 6)
        s1 = 1.0 / np.sqrt(d_in)
        s2 = 1.0 / np.sqrt(H)
        self.w1 = jax.random.uniform(k1, (d_in, H), jnp.float32, -s1, s1)
        self.b1 = jax.random.uniform(k2, (1, H), jnp.float32, -s1, s1)
        self.w2 = jax.random.uniform(k3, (H, H), jnp.float32, -s2, s2)
        self.b2 = jax.random.uniform(k4, (1, H), jnp.float32, -s2, s2)
        self.w3 = jax.random.uniform(k5, (H, d_out), jnp.float32, -s2, s2)
        self.b3 = jax.random.uniform(k6, (1, d_out), jnp.float32, -s2, s2)

        # Static 0/1 scatter matrices folding the column permutation into the
        # last layer (exact in f32: only 0/1 coefficients, disjoint columns).
        s_nc = np.zeros((d_out, nx), dtype=np.float32)
        s_nc[np.arange(d_out), self.non_control_positions] = 1.0
        s_c = np.zeros((M, nx), dtype=np.float32)
        s_c[np.arange(M), self.control_positions] = 1.0

        self.w3s = jnp.asarray(np.asarray(self.w3) @ s_nc)   # (H, nx)
        self.b3s = jnp.asarray(np.asarray(self.b3) @ s_nc)   # (1, nx)
        self.wc = jnp.asarray(s_c)                            # (M, nx)

    # ----- pallas_call wrapper -------------------------------------------------
    def _vmem_limit_bytes(self, tile_b: int) -> int:
        f32 = 4
        d_in, H, nx, M, P = self.P - self.M, self.hidden_dim, self.nx, self.M, self.P
        # double-buffered activation tiles (in + out) + resident weights/biases
        act = 2 * tile_b * P * f32 + 2 * tile_b * nx * f32
        wts = (d_in * H + H + H * H + H + H * nx + nx + M * nx) * f32
        # generous headroom, floor at 4 MiB (well under v5e's 16 MiB default).
        return int(max(4 * 1024 * 1024, 4 * (act + wts)))

    def __call__(self, y):
        B = y.shape[0]
        P, nx, H, M = self.P, self.nx, self.hidden_dim, self.M
        d_in = P - M

        # Batch tile: multiple of 8 sublanes, capped at 128 rows per step.
        tile_b = 128 if B >= 128 else _round_up(max(B, 1), 8)
        b_pad = _round_up(B, tile_b)
        y_in = y if b_pad == B else jnp.pad(y, ((0, b_pad - B), (0, 0)))

        kernel = functools.partial(decoder_fused_kernel, M=M)

        const = lambda i: (0, 0)  # weights: same block every grid step -> DMA'd once
        x = pl.pallas_call(
            kernel,
            out_shape=jax.ShapeDtypeStruct((b_pad, nx), jnp.float32),
            grid=(b_pad // tile_b,),
            in_specs=[
                pl.BlockSpec((tile_b, P), lambda i: (i, 0)),   # y tile (pipelined)
                pl.BlockSpec((d_in, H), const),                # w1
                pl.BlockSpec((1, H), const),                   # b1
                pl.BlockSpec((H, H), const),                   # w2
                pl.BlockSpec((1, H), const),                   # b2
                pl.BlockSpec((H, nx), const),                  # w3 (scatter-folded)
                pl.BlockSpec((1, nx), const),                  # b3 (scatter-folded)
                pl.BlockSpec((M, nx), const),                  # control scatter
            ],
            out_specs=pl.BlockSpec((tile_b, nx), lambda i: (i, 0)),
            compiler_params=pltpu.CompilerParams(
                dimension_semantics=("parallel",),             # megacore on v7x
                vmem_limit_bytes=self._vmem_limit_bytes(tile_b),
            ),
        )(y_in, self.w1, self.b1, self.w2, self.b2, self.w3s, self.b3s, self.wc)

        return x if b_pad == B else x[:B]


def _reference_forward(dec: DecoderPallas, y):
    """Pure-jnp reference of the original (unfused) forward semantics."""
    h1 = jnp.maximum(y[:, dec.M:] @ dec.w1 + dec.b1, 0.0)
    h2 = jnp.maximum(h1 @ dec.w2 + dec.b2, 0.0)
    x_nc = h2 @ dec.w3 + dec.b3
    x = jnp.zeros((y.shape[0], dec.nx), dtype=jnp.float32)
    x = x.at[:, dec.control_positions].set(y[:, : dec.M])
    x = x.at[:, dec.non_control_positions].set(x_nc)
    return x


if __name__ == "__main__":
    # Small shapes consistent with the module's __init__.
    nx, M, hidden_dim, P = 16, 4, 32, 8
    control_positions = [0, 5, 10, 15]
    batch = 8

    key = jax.random.PRNGKey(0)
    k_params, k_input = jax.random.split(key)

    decoder = DecoderPallas(nx, M, hidden_dim, P, control_positions, k_params)
    y = jax.random.normal(k_input, (batch, P), dtype=jnp.float32)

    x = jax.block_until_ready(decoder(y))
    x_ref = jax.block_until_ready(_reference_forward(decoder, y))
    np.testing.assert_allclose(np.asarray(x), np.asarray(x_ref), rtol=1e-5, atol=1e-5)

    print("KERNEL_OK")
</pallas_src>

<mosaic_0001>
module attributes {stable_mosaic.version = 11 : i64} {
  func.func @decoder_fused_kernel(%arg0: i32, %arg1: memref<8x8xf32, #tpu.memory_space<vmem>>, %arg2: memref<4x32xf32, #tpu.memory_space<vmem>>, %arg3: memref<1x32xf32, #tpu.memory_space<vmem>>, %arg4: memref<32x32xf32, #tpu.memory_space<vmem>>, %arg5: memref<1x32xf32, #tpu.memory_space<vmem>>, %arg6: memref<32x16xf32, #tpu.memory_space<vmem>>, %arg7: memref<1x16xf32, #tpu.memory_space<vmem>>, %arg8: memref<4x16xf32, #tpu.memory_space<vmem>>, %arg9: memref<8x16xf32, #tpu.memory_space<vmem>>) attributes {dimension_semantics = [#tpu.dimension_semantics<parallel>], iteration_bounds = array<i64: 1>, scalar_prefetch = 0 : i64, scratch_operands = 0 : i64, tpu.core_type = #tpu.core_type<tc>, window_params = [{transform_indices = @transform_0, window_bounds = array<i64: 8, 8>}, {pipeline_mode = #tpu.pipeline_mode<synchronous>, transform_indices = @transform_1, window_bounds = array<i64: 4, 32>}, {pipeline_mode = #tpu.pipeline_mode<synchronous>, transform_indices = @transform_2, window_bounds = array<i64: 1, 32>}, {pipeline_mode = #tpu.pipeline_mode<synchronous>, transform_indices = @transform_3, window_bounds = array<i64: 32, 32>}, {pipeline_mode = #tpu.pipeline_mode<synchronous>, transform_indices = @transform_4, window_bounds = array<i64: 1, 32>}, {pipeline_mode = #tpu.pipeline_mode<synchronous>, transform_indices = @transform_5, window_bounds = array<i64: 32, 16>}, {pipeline_mode = #tpu.pipeline_mode<synchronous>, transform_indices = @transform_6, window_bounds = array<i64: 1, 16>}, {pipeline_mode = #tpu.pipeline_mode<synchronous>, transform_indices = @transform_7, window_bounds = array<i64: 4, 16>}, {transform_indices = @transform_8, window_bounds = array<i64: 8, 16>}]} {
    %c0 = arith.constant 0 : index
    %c0_0 = arith.constant 0 : index
    %0 = vector.load %arg1[%c0, %c0_0] : memref<8x8xf32, #tpu.memory_space<vmem>>, vector<8x8xf32>
    %1 = vector.extract_strided_slice %0 {offsets = [0, 0], sizes = [8, 4], strides = [1, 1]} : vector<8x8xf32> to vector<8x4xf32>
    %2 = vector.extract_strided_slice %0 {offsets = [0, 4], sizes = [8, 4], strides = [1, 1]} : vector<8x8xf32> to vector<8x4xf32>
    %c0_1 = arith.constant 0 : index
    %c0_2 = arith.constant 0 : index
    %3 = vector.load %arg2[%c0_1, %c0_2] : memref<4x32xf32, #tpu.memory_space<vmem>>, vector<4x32xf32>
    %cst = arith.constant dense<0.000000e+00> : vector<8x32xf32>
    %4 = tpu.matmul %2, %3, %cst {dimension_numbers = #tpu.dot_dimension_numbers<[1], [0], [0], [1], [0, 0, 1, 1], [], []>} : vector<8x4xf32>, vector<4x32xf32>, vector<8x32xf32> -> vector<8x32xf32>
    %c0_3 = arith.constant 0 : index
    %c0_4 = arith.constant 0 : index
    %5 = vector.load %arg3[%c0_3, %c0_4] : memref<1x32xf32, #tpu.memory_space<vmem>>, vector<1x32xf32>
    %6 = vector.broadcast %5 : vector<1x32xf32> to vector<8x32xf32>
    %7 = arith.addf %4, %6 : vector<8x32xf32>
    %cst_5 = arith.constant 0.000000e+00 : f32
    %8 = vector.broadcast %cst_5 : f32 to vector<8x32xf32>
    %9 = arith.maximumf %7, %8 : vector<8x32xf32>
    %c0_6 = arith.constant 0 : index
    %c0_7 = arith.constant 0 : index
    %10 = vector.load %arg4[%c0_6, %c0_7] : memref<32x32xf32, #tpu.memory_space<vmem>>, vector<32x32xf32>
    %cst_8 = arith.constant dense<0.000000e+00> : vector<8x32xf32>
    %11 = tpu.matmul %9, %10, %cst_8 {dimension_numbers = #tpu.dot_dimension_numbers<[1], [0], [0], [1], [0, 0, 1, 1], [], []>} : vector<8x32xf32>, vector<32x32xf32>, vector<8x32xf32> -> vector<8x32xf32>
    %c0_9 = arith.constant 0 : index
    %c0_10 = arith.constant 0 : index
    %12 = vector.load %arg5[%c0_9, %c0_10] : memref<1x32xf32, #tpu.memory_space<vmem>>, vector<1x32xf32>
    %13 = vector.broadcast %12 : vector<1x32xf32> to vector<8x32xf32>
    %14 = arith.addf %11, %13 : vector<8x32xf32>
    %cst_11 = arith.constant 0.000000e+00 : f32
    %15 = vector.broadcast %cst_11 : f32 to vector<8x32xf32>
    %16 = arith.maximumf %14, %15 : vector<8x32xf32>
    %c0_12 = arith.constant 0 : index
    %c0_13 = arith.constant 0 : index
    %17 = vector.load %arg8[%c0_12, %c0_13] : memref<4x16xf32, #tpu.memory_space<vmem>>, vector<4x16xf32>
    %cst_14 = arith.constant dense<0.000000e+00> : vector<8x16xf32>
    %18 = tpu.matmul %1, %17, %cst_14 {dimension_numbers = #tpu.dot_dimension_numbers<[1], [0], [0], [1], [0, 0, 1, 1], [], []>} : vector<8x4xf32>, vector<4x16xf32>, vector<8x16xf32> -> vector<8x16xf32>
    %c0_15 = arith.constant 0 : index
    %c0_16 = arith.constant 0 : index
    %19 = vector.load %arg6[%c0_15, %c0_16] : memref<32x16xf32, #tpu.memory_space<vmem>>, vector<32x16xf32>
    %cst_17 = arith.constant dense<0.000000e+00> : vector<8x16xf32>
    %20 = tpu.matmul %16, %19, %cst_17 {dimension_numbers = #tpu.dot_dimension_numbers<[1], [0], [0], [1], [0, 0, 1, 1], [], []>} : vector<8x32xf32>, vector<32x16xf32>, vector<8x16xf32> -> vector<8x16xf32>
    %21 = arith.addf %18, %20 : vector<8x16xf32>
    %c0_18 = arith.constant 0 : index
    %c0_19 = arith.constant 0 : index
    %22 = vector.load %arg7[%c0_18, %c0_19] : memref<1x16xf32, #tpu.memory_space<vmem>>, vector<1x16xf32>
    %23 = vector.broadcast %22 : vector<1x16xf32> to vector<8x16xf32>
    %24 = arith.addf %21, %23 : vector<8x16xf32>
    %c0_20 = arith.constant 0 : index
    %c0_21 = arith.constant 0 : index
    %25 = vector.load %arg9[%c0_20, %c0_21] : memref<8x16xf32, #tpu.memory_space<vmem>>, vector<8x16xf32>
    tpu.vector_store %arg9[%c0_20, %c0_21], %24 {strides = array<i32>} : memref<8x16xf32, #tpu.memory_space<vmem>>, vector<8x16xf32>,
    return
  }
  func.func @transform_0(%arg0: i32) -> (i32, i32) {
    %c0_i32 = arith.constant 0 : i32
    %c0_i32_0 = arith.constant 0 : i32
    return %arg0, %c0_i32 : i32, i32
  }
  func.func @transform_1(%arg0: i32) -> (i32, i32) {
    %c0_i32 = arith.constant 0 : i32
    %c0_i32_0 = arith.constant 0 : i32
    %c0_i32_1 = arith.constant 0 : i32
    return %c0_i32, %c0_i32_0 : i32, i32
  }
  func.func @transform_2(%arg0: i32) -> (i32, i32) {
    %c0_i32 = arith.constant 0 : i32
    %c0_i32_0 = arith.constant 0 : i32
    %c0_i32_1 = arith.constant 0 : i32
    return %c0_i32, %c0_i32_0 : i32, i32
  }
  func.func @transform_3(%arg0: i32) -> (i32, i32) {
    %c0_i32 = arith.constant 0 : i32
    %c0_i32_0 = arith.constant 0 : i32
    %c0_i32_1 = arith.constant 0 : i32
    return %c0_i32, %c0_i32_0 : i32, i32
  }
  func.func @transform_4(%arg0: i32) -> (i32, i32) {
    %c0_i32 = arith.constant 0 : i32
    %c0_i32_0 = arith.constant 0 : i32
    %c0_i32_1 = arith.constant 0 : i32
    return %c0_i32, %c0_i32_0 : i32, i32
  }
  func.func @transform_5(%arg0: i32) -> (i32, i32) {
    %c0_i32 = arith.constant 0 : i32
    %c0_i32_0 = arith.constant 0 : i32
    %c0_i32_1 = arith.constant 0 : i32
    return %c0_i32, %c0_i32_0 : i32, i32
  }
  func.func @transform_6(%arg0: i32) -> (i32, i32) {
    %c0_i32 = arith.constant 0 : i32
    %c0_i32_0 = arith.constant 0 : i32
    %c0_i32_1 = arith.constant 0 : i32
    return %c0_i32, %c0_i32_0 : i32, i32
  }
  func.func @transform_7(%arg0: i32) -> (i32, i32) {
    %c0_i32 = arith.constant 0 : i32
    %c0_i32_0 = arith.constant 0 : i32
    %c0_i32_1 = arith.constant 0 : i32
    return %c0_i32, %c0_i32_0 : i32, i32
  }
  func.func @transform_8(%arg0: i32) -> (i32, i32) {
    %c0_i32 = arith.constant 0 : i32
    %c0_i32_0 = arith.constant 0 : i32
    return %arg0, %c0_i32 : i32, i32
  }
}

</mosaic_0001>

<llo_original>
// kernel: tpu_custom_call.1
$region0: #{tpu_custom_call.1}
  #allocation0 [shape = 'u32[]', space=smem, size = 0x4, offset = 0x4, fixed_abs, tag = 'smem constant byte address 0x4 - core index']
  #allocation1 [shape = 'u32[144,128]{1,0:T(1,128)}', space=vmem, size = 0x12000, scoped, tag = 'internal scratch']
  %s0 = inlined_call_operand.vmem [shape: f32[8,8], index: 0, kind: input, shape index: {}]
  %s1 = inlined_call_operand.vmem [shape: f32[4,32], index: 1, kind: input, shape index: {}]
  %s2 = inlined_call_operand.vmem [shape: f32[1,32], index: 2, kind: input, shape index: {}]
  %s3 = inlined_call_operand.vmem [shape: f32[32,32], index: 3, kind: input, shape index: {}]
  %s4 = inlined_call_operand.vmem [shape: f32[1,32], index: 4, kind: input, shape index: {}]
  %s5 = inlined_call_operand.vmem [shape: f32[32,16], index: 5, kind: input, shape index: {}]
  %s6 = inlined_call_operand.vmem [shape: f32[1,16], index: 6, kind: input, shape index: {}]
  %s7 = inlined_call_operand.vmem [shape: f32[4,16], index: 7, kind: input, shape index: {}]
  %s8 = inlined_call_operand.hbm [shape: f32[8,16], index: 8, kind: output, shape index: {}]
  %s9 = sld [smem:[#allocation0]]
  $region42: #{tpu_custom_call.1} parent=0
    _
  %s11 = ssub.s32 1, %s9
  %s12 = scalar_select 0, %s11, %s9
  $region1: #{tpu_custom_call.1} parent=0
    #allocation2 [shape = 'u8[4096]{0}', space=vmem, size = 0x1000, scoped, tag = 'output window, operand 0, single buffered']
    #allocation3 [shape = 's32[1]{0}', space=sflag, size = 0x4, scoped, tag = 'scoped memory for tpu_custom_call.1']
    %13 = vsyncpa [#allocation3], 0
    // Predicated region
    $region2: #{tpu_custom_call.1} parent=1 // pred_check
      _
    $region3: #{tpu_custom_call.1} parent=1 // pred_check_branch
      %15 = sbr.rel (0) target = $region5
    $region4: #{tpu_custom_call.1} parent=1 // pred_region
      _
    $region5: #{tpu_custom_call.1} parent=1 // pred_fallthru
      _
    // Predicated region
    $region6: #{tpu_custom_call.1} parent=1 // pred_check
      _
    $region7: #{tpu_custom_call.1} parent=1 // pred_check_branch
      %17 = sbr.rel (0) target = $region9
    $region8: #{tpu_custom_call.1} parent=1 // pred_region
      _
    $region9: #{tpu_custom_call.1} parent=1 // pred_fallthru
      _
    // Predicated region
    $region10: #{tpu_custom_call.1} parent=1 // pred_check
      _
    $region11: #{tpu_custom_call.1} parent=1 // pred_check_branch
      %19 = sbr.rel (0) target = $region13
    $region12: #{tpu_custom_call.1} parent=1 // pred_region
      _
    $region13: #{tpu_custom_call.1} parent=1 // pred_fallthru
      _
    // Predicated region
    $region14: #{tpu_custom_call.1} parent=1 // pred_check
      _
    $region15: #{tpu_custom_call.1} parent=1 // pred_check_branch
      %21 = sbr.rel (0) target = $region17
    $region16: #{tpu_custom_call.1} parent=1 // pred_region
      _
    $region17: #{tpu_custom_call.1} parent=1 // pred_fallthru
      _
    // Predicated region
    $region18: #{tpu_custom_call.1} parent=1 // pred_check
      _
    $region19: #{tpu_custom_call.1} parent=1 // pred_check_branch
      %23 = sbr.rel (0) target = $region21
    $region20: #{tpu_custom_call.1} parent=1 // pred_region
      _
    $region21: #{tpu_custom_call.1} parent=1 // pred_fallthru
      _
    // Predicated region
    $region22: #{tpu_custom_call.1} parent=1 // pred_check
      _
    $region23: #{tpu_custom_call.1} parent=1 // pred_check_branch
      %25 = sbr.rel (0) target = $region25
    $region24: #{tpu_custom_call.1} parent=1 // pred_region
      _
    $region25: #{tpu_custom_call.1} parent=1 // pred_fallthru
      _
    // Predicated region
    $region26: #{tpu_custom_call.1} parent=1 // pred_check
      _
    $region27: #{tpu_custom_call.1} parent=1 // pred_check_branch
      %27 = sbr.rel (0) target = $region29
    $region28: #{tpu_custom_call.1} parent=1 // pred_region
      _
    $region29: #{tpu_custom_call.1} parent=1 // pred_fallthru
      _
    // Predicated region
    $region30: #{tpu_custom_call.1} parent=1 // pred_check
      _
    $region31: #{tpu_custom_call.1} parent=1 // pred_check_branch
      %29 = sbr.rel (0) target = $region33
    $region32: #{tpu_custom_call.1} parent=1 // pred_region
      _
    $region33: #{tpu_custom_call.1} parent=1 // pred_fallthru
      _
    %v30 = vld [vmem:[%s0] sm:$0xff]
    %v31 = vld [vmem:[%s1] sm:$0xf]
    %v32 = vld [vmem:[%s2] sm:$0x1]
    %v34 = vlaneseq
    %v35 = vshrl.u32 %v34, 7
    %v36 = vsub.s32 0, %v35
    %v37 = vrot.slane %v32, %v36
    %40 = vrot.lane.b32.xlu0 %v30, 124
    %v41 = vpop.permute.xlu0 %40
    %vm42 = vcmask 31744
    %v43 = vsel %vm42, %v41, 0
    %vm45 = vcmask 1043456
    %v47 = vsel %vm45, %v31, 0
    %49 = vmatprep.subr.mxu0 0.0
    %50 = vmatpush1.msra.mxu0 %v47
    %51 = vmatprep.subr.mxu0 0.0
    %52 = vmatpush1.msra.mxu0 0.0
    %53 = vmatprep.subr.mxu0 0.0
    %54 = vmatpush1.msra.mxu0 0.0
    %55 = vmatprep.subr.mxu0 0.0
    %56 = vmatpush1.msra.mxu0 0.0
    %57 = vmatprep.subr.mxu0 0.0
    %58 = vmatpush1.msra.mxu0 0.0
    %59 = vmatprep.subr.mxu0 0.0
    %60 = vmatpush1.msra.mxu0 0.0
    %61 = vmatprep.subr.mxu0 0.0
    %62 = vmatpush1.msra.mxu0 0.0
    %63 = vmatprep.subr.mxu0 0.0
    %64 = vmatpush1.msra.mxu0 0.0
    %65 = vmatprep.subr.mxu0 0.0
    %66 = vmatpush1.msra.mxu0 0.0
    %67 = vmatprep.subr.mxu0 0.0
    %68 = vmatpush1.msra.mxu0 0.0
    %69 = vmatprep.subr.mxu0 0.0
    %70 = vmatpush1.msra.mxu0 0.0
    %71 = vmatprep.subr.mxu0 0.0
    %72 = vmatpush1.msra.mxu0 0.0
    %73 = vmatprep.subr.mxu0 0.0
    %74 = vmatpush1.msra.mxu0 0.0
    %75 = vmatprep.subr.mxu0 0.0
    %76 = vmatpush1.msra.mxu0 0.0
    %77 = vmatprep.subr.mxu0 0.0
    %78 = vmatpush1.msra.mxu0 0.0
    %79 = vmatprep.subr.mxu0 0.0
    %80 = vmatpush1.msra.mxu0 0.0
    %81 = vmatprep.subr.mxu0 0.0
    %82 = vmatpush1.msra.mxu0 0.0
    %83 = vmatprep.subr.mxu0 0.0
    %84 = vmatpush1.msra.mxu0 0.0
    %85 = vmatprep.subr.mxu0 0.0
    %86 = vmatpush1.msra.mxu0 0.0
    %87 = vmatprep.subr.mxu0 0.0
    %88 = vmatpush1.msra.mxu0 0.0
    %89 = vmatprep.subr.mxu0 0.0
    %90 = vmatpush1.msra.mxu0 0.0
    %91 = vmatprep.subr.mxu0 0.0
    %92 = vmatpush1.msra.mxu0 0.0
    %93 = vmatprep.subr.mxu0 0.0
    %94 = vmatpush1.msra.mxu0 0.0
    %95 = vmatprep.subr.mxu0 0.0
    %96 = vmatpush1.msra.mxu0 0.0
    %97 = vmatprep.subr.mxu0 0.0
    %98 = vmatpush1.msra.mxu0 0.0
    %99 = vmatprep.subr.mxu0 0.0
    %100 = vmatpush1.msra.mxu0 0.0
    %101 = vmatprep.subr.mxu0 0.0
    %102 = vmatpush1.msra.mxu0 0.0
    %103 = vmatprep.subr.mxu0 0.0
    %104 = vmatpush1.msra.mxu0 0.0
    %105 = vmatprep.subr.mxu0 0.0
    %106 = vmatpush1.msra.mxu0 0.0
    %107 = vmatprep.subr.mxu0 0.0
    %108 = vmatpush1.msra.mxu0 0.0
    %109 = vmatprep.subr.mxu0 0.0
    %110 = vmatpush1.msra.mxu0 0.0
    %111 = vmatprep.subr.mxu0 0.0
    %112 = vmatpush1.msra.mxu0 0.0
    %113 = vmatprep.mubr.f32.mxu0 0.0
    %114 = vmatmul.mubr.f32.gmra.mrb[0].mxu0 %v43
    %v115 = vpop.f32.mrb[0].mxu0
    %v116 = vadd.f32 %v37, %v115
    %v117 = vpop.f32.mrb[0].mxu0
    %118 = vdwg.mxu0
    %v119 = vmax.f32 %v116, 0.0
    %v120 = vld [vmem:[%s3] sm:$0xff]
    %v121 = vld [vmem:[%s3 + $0x8] sm:$0xff]
    %v122 = vld [vmem:[%s3 + $0x10] sm:$0xff]
    %v123 = vld [vmem:[%s3 + $0x18] sm:$0xff]
    %v124 = vld [vmem:[%s4] sm:$0x1]
    %v126 = vlaneseq
    %v127 = vshrl.u32 %v126, 7
    %v128 = vsub.s32 0, %v127
    %v129 = vrot.slane %v124, %v128
    %vm131 = vcmask 261120
    %v133 = vsel %vm131, %v119, 0
    %135 = vmatprep.subr.mxu0 0.0
    %136 = vmatpush1.msra.mxu0 %v120
    %137 = vmatprep.subr.mxu0 0.0
    %138 = vmatpush1.msra.mxu0 %v121
    %139 = vmatprep.subr.mxu0 0.0
    %140 = vmatpush1.msra.mxu0 %v122
    %141 = vmatprep.subr.mxu0 0.0
    %142 = vmatpush1.msra.mxu0 %v123
    %143 = vmatprep.subr.mxu0 0.0
    %144 = vmatpush1.msra.mxu0 0.0
    %145 = vmatprep.subr.mxu0 0.0
    %146 = vmatpush1.msra.mxu0 0.0
    %147 = vmatprep.subr.mxu0 0.0
    %148 = vmatpush1.msra.mxu0 0.0
    %149 = vmatprep.subr.mxu0 0.0
    %150 = vmatpush1.msra.mxu0 0.0
    %151 = vmatprep.subr.mxu0 0.0
    %152 = vmatpush1.msra.mxu0 0.0
    %153 = vmatprep.subr.mxu0 0.0
    %154 = vmatpush1.msra.mxu0 0.0
    %155 = vmatprep.subr.mxu0 0.0
    %156 = vmatpush1.msra.mxu0 0.0
    %157 = vmatprep.subr.mxu0 0.0
    %158 = vmatpush1.msra.mxu0 0.0
    %159 = vmatprep.subr.mxu0 0.0
    %160 = vmatpush1.msra.mxu0 0.0
    %161 = vmatprep.subr.mxu0 0.0
    %162 = vmatpush1.msra.mxu0 0.0
    %163 = vmatprep.subr.mxu0 0.0
    %164 = vmatpush1.msra.mxu0 0.0
    %165 = vmatprep.subr.mxu0 0.0
    %166 = vmatpush1.msra.mxu0 0.0
    %167 = vmatprep.subr.mxu0 0.0
    %168 = vmatpush1.msra.mxu0 0.0
    %169 = vmatprep.subr.mxu0 0.0
    %170 = vmatpush1.msra.mxu0 0.0
    %171 = vmatprep.subr.mxu0 0.0
    %172 = vmatpush1.msra.mxu0 0.0
    %173 = vmatprep.subr.mxu0 0.0
    %174 = vmatpush1.msra.mxu0 0.0
    %175 = vmatprep.subr.mxu0 0.0
    %176 = vmatpush1.msra.mxu0 0.0
    %177 = vmatprep.subr.mxu0 0.0
    %178 = vmatpush1.msra.mxu0 0.0
    %179 = vmatprep.subr.mxu0 0.0
    %180 = vmatpush1.msra.mxu0 0.0
    %181 = vmatprep.subr.mxu0 0.0
    %182 = vmatpush1.msra.mxu0 0.0
    %183 = vmatprep.subr.mxu0 0.0
    %184 = vmatpush1.msra.mxu0 0.0
    %185 = vmatprep.subr.mxu0 0.0
    %186 = vmatpush1.msra.mxu0 0.0
    %187 = vmatprep.subr.mxu0 0.0
    %188 = vmatpush1.msra.mxu0 0.0
    %189 = vmatprep.subr.mxu0 0.0
    %190 = vmatpush1.msra.mxu0 0.0
    %191 = vmatprep.subr.mxu0 0.0
    %192 = vmatpush1.msra.mxu0 0.0
    %193 = vmatprep.subr.mxu0 0.0
    %194 = vmatpush1.msra.mxu0 0.0
    %195 = vmatprep.subr.mxu0 0.0
    %196 = vmatpush1.msra.mxu0 0.0
    %197 = vmatprep.subr.mxu0 0.0
    %198 = vmatpush1.msra.mxu0 0.0
    %199 = vmatprep.mubr.f32.mxu0 0.0
    %200 = vmatmul.mubr.f32.gmra.mrb[0].mxu0 %v133
    %v201 = vpop.f32.mrb[0].mxu0
    %v202 = vadd.f32 %v129, %v201
    %v203 = vpop.f32.mrb[0].mxu0
    %204 = vdwg.mxu0
    %v205 = vmax.f32 %v202, 0.0
    %v206 = vld [vmem:[%s7] sm:$0xf]
    %v207 = vld [vmem:[%s5] sm:$0xff]
    %v208 = vld [vmem:[%s5 + $0x8] sm:$0xff]
    %v209 = vld [vmem:[%s5 + $0x10] sm:$0xff]
    %v210 = vld [vmem:[%s5 + $0x18] sm:$0xff]
    %v212 = vsel %vm131, %v205, 0
    %214 = vmatprep.subr.mxu0 0.0
    %215 = vmatpush1.msra.mxu0 %v207
    %216 = vmatprep.subr.mxu0 0.0
    %217 = vmatpush1.msra.mxu0 %v208
    %218 = vmatprep.subr.mxu0 0.0
    %219 = vmatpush1.msra.mxu0 %v209
    %220 = vmatprep.subr.mxu0 0.0
    %221 = vmatpush1.msra.mxu0 %v210
    %222 = vmatprep.subr.mxu0 0.0
    %223 = vmatpush1.msra.mxu0 0.0
    %224 = vmatprep.subr.mxu0 0.0
    %225 = vmatpush1.msra.mxu0 0.0
    %226 = vmatprep.subr.mxu0 0.0
    %227 = vmatpush1.msra.mxu0 0.0
    %228 = vmatprep.subr.mxu0 0.0
    %229 = vmatpush1.msra.mxu0 0.0
    %230 = vmatprep.subr.mxu0 0.0
    %231 = vmatpush1.msra.mxu0 0.0
    %232 = vmatprep.subr.mxu0 0.0
    %233 = vmatpush1.msra.mxu0 0.0
    %234 = vmatprep.subr.mxu0 0.0
    %235 = vmatpush1.msra.mxu0 0.0
    %236 = vmatprep.subr.mxu0 0.0
    %237 = vmatpush1.msra.mxu0 0.0
    %238 = vmatprep.subr.mxu0 0.0
    %239 = vmatpush1.msra.mxu0 0.0
    %240 = vmatprep.subr.mxu0 0.0
    %241 = vmatpush1.msra.mxu0 0.0
    %242 = vmatprep.subr.mxu0 0.0
    %243 = vmatpush1.msra.mxu0 0.0
    %244 = vmatprep.subr.mxu0 0.0
    %245 = vmatpush1.msra.mxu0 0.0
    %246 = vmatprep.subr.mxu0 0.0
    %247 = vmatpush1.msra.mxu0 0.0
    %248 = vmatprep.subr.mxu0 0.0
    %249 = vmatpush1.msra.mxu0 0.0
    %250 = vmatprep.subr.mxu0 0.0
    %251 = vmatpush1.msra.mxu0 0.0
    %252 = vmatprep.subr.mxu0 0.0
    %253 = vmatpush1.msra.mxu0 0.0
    %254 = vmatprep.subr.mxu0 0.0
    %255 = vmatpush1.msra.mxu0 0.0
    %256 = vmatprep.subr.mxu0 0.0
    %257 = vmatpush1.msra.mxu0 0.0
    %258 = vmatprep.subr.mxu0 0.0
    %259 = vmatpush1.msra.mxu0 0.0
    %260 = vmatprep.subr.mxu0 0.0
    %261 = vmatpush1.msra.mxu0 0.0
    %262 = vmatprep.subr.mxu0 0.0
    %263 = vmatpush1.msra.mxu0 0.0
    %264 = vmatprep.subr.mxu0 0.0
    %265 = vmatpush1.msra.mxu0 0.0
    %266 = vmatprep.subr.mxu0 0.0
    %267 = vmatpush1.msra.mxu0 0.0
    %268 = vmatprep.subr.mxu0 0.0
    %269 = vmatpush1.msra.mxu0 0.0
    %270 = vmatprep.subr.mxu0 0.0
    %271 = vmatpush1.msra.mxu0 0.0
    %272 = vmatprep.subr.mxu0 0.0
    %273 = vmatpush1.msra.mxu0 0.0
    %274 = vmatprep.subr.mxu0 0.0
    %275 = vmatpush1.msra.mxu0 0.0
    %276 = vmatprep.subr.mxu0 0.0
    %277 = vmatpush1.msra.mxu0 0.0
    %278 = vmatprep.mubr.f32.mxu0 0.0
    %279 = vmatmul.mubr.f32.gmra.mrb[0].mxu0 %v212
    %v280 = vpop.f32.mrb[0].mxu0
    %v281 = vadd.f32 0.0, %v280
    %v282 = vpop.f32.mrb[0].mxu0
    %283 = vdwg.mxu0
    %v284 = vsel %vm42, %v30, 0
    %v287 = vsel %vm45, %v206, 0
    %289 = vmatprep.subr.mxu0 0.0
    %290 = vmatpush1.msra.mxu0 %v287
    %291 = vmatprep.subr.mxu0 0.0
    %292 = vmatpush1.msra.mxu0 0.0
    %293 = vmatprep.subr.mxu0 0.0
    %294 = vmatpush1.msra.mxu0 0.0
    %295 = vmatprep.subr.mxu0 0.0
    %296 = vmatpush1.msra.mxu0 0.0
    %297 = vmatprep.subr.mxu0 0.0
    %298 = vmatpush1.msra.mxu0 0.0
    %299 = vmatprep.subr.mxu0 0.0
    %300 = vmatpush1.msra.mxu0 0.0
    %301 = vmatprep.subr.mxu0 0.0
    %302 = vmatpush1.msra.mxu0 0.0
    %303 = vmatprep.subr.mxu0 0.0
    %304 = vmatpush1.msra.mxu0 0.0
    %305 = vmatprep.subr.mxu0 0.0
    %306 = vmatpush1.msra.mxu0 0.0
    %307 = vmatprep.subr.mxu0 0.0
    %308 = vmatpush1.msra.mxu0 0.0
    %309 = vmatprep.subr.mxu0 0.0
    %310 = vmatpush1.msra.mxu0 0.0
    %311 = vmatprep.subr.mxu0 0.0
    %312 = vmatpush1.msra.mxu0 0.0
    %313 = vmatprep.subr.mxu0 0.0
    %314 = vmatpush1.msra.mxu0 0.0
    %315 = vmatprep.subr.mxu0 0.0
    %316 = vmatpush1.msra.mxu0 0.0
    %317 = vmatprep.subr.mxu0 0.0
    %318 = vmatpush1.msra.mxu0 0.0
    %319 = vmatprep.subr.mxu0 0.0
    %320 = vmatpush1.msra.mxu0 0.0
    %321 = vmatprep.subr.mxu0 0.0
    %322 = vmatpush1.msra.mxu0 0.0
    %323 = vmatprep.subr.mxu0 0.0
    %324 = vmatpush1.msra.mxu0 0.0
    %325 = vmatprep.subr.mxu0 0.0
    %326 = vmatpush1.msra.mxu0 0.0
    %327 = vmatprep.subr.mxu0 0.0
    %328 = vmatpush1.msra.mxu0 0.0
    %329 = vmatprep.subr.mxu0 0.0
    %330 = vmatpush1.msra.mxu0 0.0
    %331 = vmatprep.subr.mxu0 0.0
    %332 = vmatpush1.msra.mxu0 0.0
    %333 = vmatprep.subr.mxu0 0.0
    %334 = vmatpush1.msra.mxu0 0.0
    %335 = vmatprep.subr.mxu0 0.0
    %336 = vmatpush1.msra.mxu0 0.0
    %337 = vmatprep.subr.mxu0 0.0
    %338 = vmatpush1.msra.mxu0 0.0
    %339 = vmatprep.subr.mxu0 0.0
    %340 = vmatpush1.msra.mxu0 0.0
    %341 = vmatprep.subr.mxu0 0.0
    %342 = vmatpush1.msra.mxu0 0.0
    %343 = vmatprep.subr.mxu0 0.0
    %344 = vmatpush1.msra.mxu0 0.0
    %345 = vmatprep.subr.mxu0 0.0
    %346 = vmatpush1.msra.mxu0 0.0
    %347 = vmatprep.subr.mxu0 0.0
    %348 = vmatpush1.msra.mxu0 0.0
    %349 = vmatprep.subr.mxu0 0.0
    %350 = vmatpush1.msra.mxu0 0.0
    %351 = vmatprep.subr.mxu0 0.0
    %352 = vmatpush1.msra.mxu0 0.0
    %353 = vmatprep.mubr.f32.mxu0 0.0
    %354 = vmatmul.mubr.f32.gmra.mrb[0].mxu0 %v284
    %v355 = vpop.f32.mrb[0].mxu0
    %v356 = vadd.f32 %v281, %v355
    %v357 = vpop.f32.mrb[0].mxu0
    %358 = vdwg.mxu0
    %v359 = vld [vmem:[%s6] sm:$0x1]
    %v361 = vlaneseq
    %v362 = vshrl.u32 %v361, 7
    %v363 = vsub.s32 0, %v362
    %v364 = vrot.slane %v359, %v363
    %v366 = vadd.f32 %v356, %v364
    %vm367 = vcmask 130048
    %368 = vst.msk [vmem:[#allocation2] sm:$0xff] %vm367, %v366
    // Predicated region
    $region34: #{tpu_custom_call.1} parent=1 // pred_check
      _
    $region35: #{tpu_custom_call.1} parent=1 // pred_check_branch
      %370 = sbr.rel (0) target = $region37
    $region36: #{tpu_custom_call.1} parent=1 // pred_region
      %s372 = ssub.s32 128, 128
      %373 = vsyncadd [#allocation3], %s372
      %s375 = sshll.u32 [#allocation2], 4
      %s376 = int_to_ptr.vmem [resolvable:$true] %s375
      %378 = dma.vmem_to_hbm [thread:$0]  %s376, 128, %s8, [#allocation3]
    $region37: #{tpu_custom_call.1} parent=1 // pred_fallthru
      _
    // Predicated region
    $region38: #{tpu_custom_call.1} parent=1 // pred_check
      _
    $region39: #{tpu_custom_call.1} parent=1 // pred_check_branch
      %380 = sbr.rel (0) target = $region41
    $region40: #{tpu_custom_call.1} parent=1 // pred_region
      %381 = dma.done [#allocation3], 128
    $region41: #{tpu_custom_call.1} parent=1 // pred_fallthru
      _
    %382 = vsyncpa [#allocation3], 1

</llo_original>
